<compile_context>
chip_gen: v7x
topology: tpu7x:2x2x1
jax: 0.10.0
libtpu: 0.0.40
codegen_flags: <defaults>
</compile_context>

<pallas_src>
import jax
import jax.numpy as jnp
from jax.experimental import pallas as pl
from jax.experimental.pallas import tpu as pltpu


def _round_up(x, m):
    return (x + m - 1) // m * m


def hepa_forward(x_nchw, wconv_pt, bconv, whead_pt, bhead, *, tile_rows=128):
    """Fused synthetic-backbone + classifier forward.

    x_nchw:   (B, C, H, W) float32 (PyTorch layout)
    wconv_pt: (F, C, 3, 3) conv stem weight (PyTorch layout)
    bconv:    (F,)         conv stem bias
    whead_pt: (n_class, F) classifier weight (PyTorch nn.Linear layout)
    bhead:    (n_class,)   classifier bias
    returns:  (B, n_class) float32 logits
    """
    B, C, H, W = x_nchw.shape
    F = wconv_pt.shape[0]
    n_class = whead_pt.shape[0]
    R = H * W                      # spatial positions per image
    K = 9 * C                      # im2col contraction size

    # Lane-dense padded sizes.
    K_pad = _round_up(K, 128)
    F_pad = _round_up(F, 128)
    C_pad = _round_up(n_class, 128)

    # Row tile: multiple of 8 sublanes.  128 keeps the per-step working set
    # tiny (<< 1 MiB here); for a real backbone re-derive from the VMEM budget
    # (larger on v5e/v6e 128 MiB, roughly half that tile height on v7x 64 MiB).
    tile_rows = min(tile_rows, _round_up(R, 8))
    R_pad = _round_up(R, tile_rows)
    num_tiles = R_pad // tile_rows

    # ---------------- im2col + weight re-layout (plain JAX / XLA) -----------
    x_nhwc = jnp.transpose(x_nchw, (0, 2, 3, 1))                  # (B,H,W,C)
    xp = jnp.pad(x_nhwc, ((0, 0), (1, 1), (1, 1), (0, 0)))        # zero pad=1
    taps = [xp[:, ky:ky + H, kx:kx + W, :]                        # tap-major
            for ky in range(3) for kx in range(3)]
    patches = jnp.stack(taps, axis=3).reshape(B, R, K)            # (B,H*W,9*C)
    patches = jnp.pad(patches, ((0, 0), (0, R_pad - R), (0, K_pad - K)))
    patches = patches.astype(jnp.bfloat16)                        # bf16 -> MXU

    wconv = jnp.transpose(wconv_pt, (2, 3, 1, 0)).reshape(K, F)   # [ky,kx,c],F
    wconv = jnp.pad(wconv, ((0, K_pad - K), (0, F_pad - F))).astype(jnp.bfloat16)
    bconv_p = jnp.pad(bconv.reshape(1, F),
                      ((0, 0), (0, F_pad - F))).astype(jnp.float32)

    # Fold the 1/(H*W) mean-pool scale into the head weight.
    whead = (jnp.transpose(whead_pt, (1, 0)) / float(R))
    whead = jnp.pad(whead, ((0, F_pad - F),
                            (0, C_pad - n_class))).astype(jnp.float32)
    bhead_p = jnp.pad(bhead.reshape(1, n_class),
                      ((0, 0), (0, C_pad - n_class))).astype(jnp.float32)

    needs_mask = (R % tile_rows) != 0

    # ---------------------------- Pallas kernel -----------------------------
    def kernel(patch_ref, wconv_ref, bconv_ref, whead_ref, bhead_ref,
               out_ref, acc_ref):
        t = pl.program_id(1)

        @pl.when(t == 0)
        def _():
            acc_ref[...] = jnp.zeros_like(acc_ref)

        # One fused K=K_pad matmul: (tile_rows, K_pad) @ (K_pad, F_pad).
        conv = jnp.dot(patch_ref[0], wconv_ref[...],
                       preferred_element_type=jnp.float32)
        conv = jnp.maximum(conv + bconv_ref[...], 0.0)            # bias + ReLU

        if needs_mask:  # zero-out padded spatial rows so they don't pollute the pool
            row = t * tile_rows + jax.lax.broadcasted_iota(
                jnp.int32, (tile_rows, 1), 0)
            conv = jnp.where(row < R, conv, 0.0)

        # Running pooled sum for this batch element (mean scale folded in whead).
        acc_ref[...] += jnp.sum(conv, axis=0, keepdims=True)

        @pl.when(t == pl.num_programs(1) - 1)
        def _():
            logits = jnp.dot(acc_ref[...], whead_ref[...],
                             preferred_element_type=jnp.float32) + bhead_ref[...]
            out_ref[0] = logits.astype(out_ref.dtype)

    flops = 2 * B * R_pad * K_pad * F_pad + 2 * B * F_pad * C_pad
    bytes_accessed = (patches.size * 2 + wconv.size * 2
                      + (bconv_p.size + whead.size + bhead_p.size) * 4
                      + B * C_pad * 4)

    out = pl.pallas_call(
        kernel,
        out_shape=jax.ShapeDtypeStruct((B, 1, C_pad), jnp.float32),
        grid_spec=pltpu.PrefetchScalarGridSpec(
            num_scalar_prefetch=0,
            grid=(B, num_tiles),
            in_specs=[
                pl.BlockSpec((1, tile_rows, K_pad), lambda b, t: (b, t, 0)),
                pl.BlockSpec((K_pad, F_pad), lambda b, t: (0, 0)),   # resident
                pl.BlockSpec((1, F_pad), lambda b, t: (0, 0)),       # resident
                pl.BlockSpec((F_pad, C_pad), lambda b, t: (0, 0)),   # resident
                pl.BlockSpec((1, C_pad), lambda b, t: (0, 0)),       # resident
            ],
            out_specs=pl.BlockSpec((1, 1, C_pad), lambda b, t: (b, 0, 0)),
            scratch_shapes=[pltpu.VMEM((1, F_pad), jnp.float32)],
        ),
        compiler_params=pltpu.CompilerParams(
            dimension_semantics=("parallel", "arbitrary"),
            vmem_limit_bytes=32 * 1024 * 1024,
        ),
        cost_estimate=pl.CostEstimate(
            flops=flops, transcendentals=0, bytes_accessed=bytes_accessed),
    )(patches, wconv, bconv_p, whead, bhead_p)

    return out[:, 0, :n_class]


if __name__ == "__main__":
    # Small deterministic shapes consistent with the module's forward:
    # image batch NCHW -> (B, n_class) logits.
    B, C, H, W = 2, 3, 16, 16
    n_features = 32        # synthetic backbone feature width (classifier.in_features)
    n_class = 4            # HepaClassifier n_class

    key = jax.random.PRNGKey(0)
    kx, kw1, kb1, kw2, kb2 = jax.random.split(key, 5)

    x = jax.random.normal(kx, (B, C, H, W), dtype=jnp.float32)
    wconv_pt = jax.random.normal(kw1, (n_features, C, 3, 3), dtype=jnp.float32) * 0.1
    bconv = jax.random.normal(kb1, (n_features,), dtype=jnp.float32) * 0.1
    whead_pt = jax.random.normal(kw2, (n_class, n_features), dtype=jnp.float32) * 0.1
    bhead = jax.random.normal(kb2, (n_class,), dtype=jnp.float32) * 0.1

    logits = hepa_forward(x, wconv_pt, bconv, whead_pt, bhead)
    jax.block_until_ready(logits)
    assert logits.shape == (B, n_class) and logits.dtype == jnp.float32

    # Pure-JAX reference (same math; inputs bf16-rounded to match the MXU feed).
    x_bf = x.astype(jnp.bfloat16).astype(jnp.float32)
    w_bf = wconv_pt.astype(jnp.bfloat16).astype(jnp.float32)
    x_nhwc = jnp.transpose(x_bf, (0, 2, 3, 1))
    ref = jax.lax.conv_general_dilated(
        x_nhwc, jnp.transpose(w_bf, (2, 3, 1, 0)),
        window_strides=(1, 1), padding="SAME",
        dimension_numbers=("NHWC", "HWIO", "NHWC"),
        precision=jax.lax.Precision.HIGHEST)
    ref = jnp.maximum(ref + bconv[None, None, None, :], 0.0)
    ref_feat = ref.mean(axis=(1, 2))
    ref_logits = jnp.dot(ref_feat, whead_pt.T,
                         precision=jax.lax.Precision.HIGHEST) + bhead
    assert jnp.allclose(logits, ref_logits, atol=1e-2, rtol=1e-2), (
        jnp.max(jnp.abs(logits - ref_logits)))

    print("KERNEL_OK")
</pallas_src>

<mosaic_0001>
module attributes {stable_mosaic.version = 11 : i64} {
  func.func @kernel(%arg0: i32, %arg1: i32, %arg2: memref<1x128x128xbf16, #tpu.memory_space<vmem>>, %arg3: memref<128x128xbf16, #tpu.memory_space<vmem>>, %arg4: memref<1x128xf32, #tpu.memory_space<vmem>>, %arg5: memref<128x128xf32, #tpu.memory_space<vmem>>, %arg6: memref<1x128xf32, #tpu.memory_space<vmem>>, %arg7: memref<1x1x128xf32, #tpu.memory_space<vmem>>, %arg8: memref<1x128xf32, #tpu.memory_space<vmem>>) attributes {dimension_semantics = [#tpu.dimension_semantics<parallel>, #tpu.dimension_semantics<arbitrary>], iteration_bounds = array<i64: 2, 2>, scalar_prefetch = 0 : i64, scratch_operands = 1 : i64, tpu.core_type = #tpu.core_type<tc>, window_params = [{transform_indices = @transform_0, window_bounds = array<i64: 1, 128, 128>}, {pipeline_mode = #tpu.pipeline_mode<synchronous>, transform_indices = @transform_1, window_bounds = array<i64: 128, 128>}, {pipeline_mode = #tpu.pipeline_mode<synchronous>, transform_indices = @transform_2, window_bounds = array<i64: 1, 128>}, {pipeline_mode = #tpu.pipeline_mode<synchronous>, transform_indices = @transform_3, window_bounds = array<i64: 128, 128>}, {pipeline_mode = #tpu.pipeline_mode<synchronous>, transform_indices = @transform_4, window_bounds = array<i64: 1, 128>}, {transform_indices = @transform_5, window_bounds = array<i64: 1, 1, 128>}]} {
    %c0_i32 = arith.constant 0 : i32
    %0 = arith.cmpi eq, %arg1, %c0_i32 : i32
    %1 = arith.extui %0 : i1 to i32
    %c0_i32_0 = arith.constant 0 : i32
    %2 = arith.cmpi ne, %1, %c0_i32_0 : i32
    scf.if %2 {
      %cst_14 = arith.constant 0.000000e+00 : f32
      %20 = vector.broadcast %cst_14 : f32 to vector<1x128xf32>
      %c0_15 = arith.constant 0 : index
      %c0_16 = arith.constant 0 : index
      %21 = vector.load %arg8[%c0_15, %c0_16] : memref<1x128xf32, #tpu.memory_space<vmem>>, vector<1x128xf32>
      tpu.vector_store %arg8[%c0_15, %c0_16], %20 {strides = array<i32>} : memref<1x128xf32, #tpu.memory_space<vmem>>, vector<1x128xf32>,
    } else {
    }
    %c0 = arith.constant 0 : index
    %c0_1 = arith.constant 0 : index
    %c0_2 = arith.constant 0 : index
    %3 = vector.load %arg2[%c0, %c0_1, %c0_2] : memref<1x128x128xbf16, #tpu.memory_space<vmem>>, vector<1x128x128xbf16>
    %4 = vector.shape_cast %3 : vector<1x128x128xbf16> to vector<128x128xbf16>
    %c0_3 = arith.constant 0 : index
    %c0_4 = arith.constant 0 : index
    %5 = vector.load %arg3[%c0_3, %c0_4] : memref<128x128xbf16, #tpu.memory_space<vmem>>, vector<128x128xbf16>
    %cst = arith.constant dense<0.000000e+00> : vector<128x128xf32>
    %6 = tpu.matmul %4, %5, %cst {dimension_numbers = #tpu.dot_dimension_numbers<[1], [0], [0], [1], [0, 0, 1, 1], [], []>} : vector<128x128xbf16>, vector<128x128xbf16>, vector<128x128xf32> -> vector<128x128xf32>
    %c0_5 = arith.constant 0 : index
    %c0_6 = arith.constant 0 : index
    %7 = vector.load %arg4[%c0_5, %c0_6] : memref<1x128xf32, #tpu.memory_space<vmem>>, vector<1x128xf32>
    %8 = vector.broadcast %7 : vector<1x128xf32> to vector<128x128xf32>
    %9 = arith.addf %6, %8 : vector<128x128xf32>
    %cst_7 = arith.constant 0.000000e+00 : f32
    %10 = vector.broadcast %cst_7 : f32 to vector<128x128xf32>
    %11 = arith.maximumf %9, %10 : vector<128x128xf32>
    %c0_8 = arith.constant 0 : index
    %c0_9 = arith.constant 0 : index
    %12 = vector.load %arg8[%c0_8, %c0_9] : memref<1x128xf32, #tpu.memory_space<vmem>>, vector<1x128xf32>
    %cst_10 = arith.constant dense<0.000000e+00> : vector<128xf32>
    %13 = vector.multi_reduction <add>, %11, %cst_10 [0] : vector<128x128xf32> to vector<128xf32>
    %14 = vector.shape_cast %13 : vector<128xf32> to vector<1x128xf32>
    %15 = arith.addf %12, %14 : vector<1x128xf32>
    %c0_11 = arith.constant 0 : index
    %c0_12 = arith.constant 0 : index
    %16 = vector.load %arg8[%c0_11, %c0_12] : memref<1x128xf32, #tpu.memory_space<vmem>>, vector<1x128xf32>
    tpu.vector_store %arg8[%c0_11, %c0_12], %15 {strides = array<i32>} : memref<1x128xf32, #tpu.memory_space<vmem>>, vector<1x128xf32>,
    %c1_i32 = arith.constant 1 : i32
    %17 = arith.cmpi eq, %arg1, %c1_i32 : i32
    %18 = arith.extui %17 : i1 to i32
    %c0_i32_13 = arith.constant 0 : i32
    %19 = arith.cmpi ne, %18, %c0_i32_13 : i32
    scf.if %19 {
      %c0_14 = arith.constant 0 : index
      %c0_15 = arith.constant 0 : index
      %20 = vector.load %arg8[%c0_14, %c0_15] : memref<1x128xf32, #tpu.memory_space<vmem>>, vector<1x128xf32>
      %c0_16 = arith.constant 0 : index
      %c0_17 = arith.constant 0 : index
      %21 = vector.load %arg5[%c0_16, %c0_17] : memref<128x128xf32, #tpu.memory_space<vmem>>, vector<128x128xf32>
      %cst_18 = arith.constant dense<0.000000e+00> : vector<1x128xf32>
      %22 = tpu.matmul %20, %21, %cst_18 {dimension_numbers = #tpu.dot_dimension_numbers<[1], [0], [0], [1], [0, 0, 1, 1], [], []>} : vector<1x128xf32>, vector<128x128xf32>, vector<1x128xf32> -> vector<1x128xf32>
      %c0_19 = arith.constant 0 : index
      %c0_20 = arith.constant 0 : index
      %23 = vector.load %arg6[%c0_19, %c0_20] : memref<1x128xf32, #tpu.memory_space<vmem>>, vector<1x128xf32>
      %24 = arith.addf %22, %23 : vector<1x128xf32>
      %c0_21 = arith.constant 0 : index
      %c0_22 = arith.constant 0 : index
      %c0_23 = arith.constant 0 : index
      %25 = vector.load %arg7[%c0_21, %c0_22, %c0_23] : memref<1x1x128xf32, #tpu.memory_space<vmem>>, vector<1x1x128xf32>
      %26 = vector.shape_cast %25 : vector<1x1x128xf32> to vector<1x128xf32>
      %27 = vector.shape_cast %24 : vector<1x128xf32> to vector<1x1x128xf32>
      tpu.vector_store %arg7[%c0_21, %c0_22, %c0_23], %27 {strides = array<i32>} : memref<1x1x128xf32, #tpu.memory_space<vmem>>, vector<1x1x128xf32>,
    } else {
    }
    return
  }
  func.func @transform_0(%arg0: i32, %arg1: i32) -> (i32, i32, i32) {
    %c0_i32 = arith.constant 0 : i32
    %c0_i32_0 = arith.constant 0 : i32
    return %arg0, %arg1, %c0_i32 : i32, i32, i32
  }
  func.func @transform_1(%arg0: i32, %arg1: i32) -> (i32, i32) {
    %c0_i32 = arith.constant 0 : i32
    %c0_i32_0 = arith.constant 0 : i32
    %c0_i32_1 = arith.constant 0 : i32
    return %c0_i32, %c0_i32_0 : i32, i32
  }
  func.func @transform_2(%arg0: i32, %arg1: i32) -> (i32, i32) {
    %c0_i32 = arith.constant 0 : i32
    %c0_i32_0 = arith.constant 0 : i32
    %c0_i32_1 = arith.constant 0 : i32
    return %c0_i32, %c0_i32_0 : i32, i32
  }
  func.func @transform_3(%arg0: i32, %arg1: i32) -> (i32, i32) {
    %c0_i32 = arith.constant 0 : i32
    %c0_i32_0 = arith.constant 0 : i32
    %c0_i32_1 = arith.constant 0 : i32
    return %c0_i32, %c0_i32_0 : i32, i32
  }
  func.func @transform_4(%arg0: i32, %arg1: i32) -> (i32, i32) {
    %c0_i32 = arith.constant 0 : i32
    %c0_i32_0 = arith.constant 0 : i32
    %c0_i32_1 = arith.constant 0 : i32
    return %c0_i32, %c0_i32_0 : i32, i32
  }
  func.func @transform_5(%arg0: i32, %arg1: i32) -> (i32, i32, i32) {
    %c0_i32 = arith.constant 0 : i32
    %c0_i32_0 = arith.constant 0 : i32
    %c0_i32_1 = arith.constant 0 : i32
    return %arg0, %c0_i32, %c0_i32_0 : i32, i32, i32
  }
}

</mosaic_0001>

<llo_original>
// kernel: tpu_custom_call.1
$region0: #{tpu_custom_call.1}
  #allocation0 [shape = 'u32[]', space=smem, size = 0x4, offset = 0x4, fixed_abs, tag = 'smem constant byte address 0x4 - core index']
  #allocation1 [shape = 'u32[144,128]{1,0:T(1,128)}', space=vmem, size = 0x12000, scoped, tag = 'internal scratch']
  #allocation2 [shape = 'f32[1,128]{1,0:T(1,128)}', space=vmem, size = 0x200, scoped, tag = 'scratch operand']
  %s0 = inlined_call_operand.hbm [shape: bf16[2,256,128], index: 0, kind: input, shape index: {}]
  %s1 = inlined_call_operand.hbm [shape: bf16[128,128], index: 1, kind: input, shape index: {}]
  %s2 = inlined_call_operand.vmem [shape: f32[1,128], index: 2, kind: input, shape index: {}]
  %s3 = inlined_call_operand.hbm [shape: f32[128,128], index: 3, kind: input, shape index: {}]
  %s4 = inlined_call_operand.vmem [shape: f32[1,128], index: 4, kind: input, shape index: {}]
  %s5 = inlined_call_operand.hbm [shape: f32[2,1,128], index: 5, kind: output, shape index: {}]
  %s6 = sld [smem:[#allocation0]]
  $region73: #{tpu_custom_call.1} parent=0
    _
  %s8 = ssub.s32 1, %s6
  %s9 = scalar_select 0, %s8, %s6
  $region1: #{tpu_custom_call.1} parent=0
    #allocation3 [shape = 'u8[65536]{0}', space=vmem, size = 0x10000, scoped, tag = 'input window, operand 0']
    #allocation4 [shape = 's32[2]{0}', space=sflag, size = 0x8, scoped, tag = 'scoped memory for tpu_custom_call.1']
    #allocation5 [shape = 's32[2]{0}', space=sflag, size = 0x8, scoped, tag = 'scoped memory for tpu_custom_call.1']
    #allocation6 [shape = 'u8[32768]{0}', space=vmem, size = 0x8000, scoped, tag = 'input window, operand 1, single buffered']
    #allocation7 [shape = 's32[1]{0}', space=sflag, size = 0x4, scoped, tag = 'scoped memory for tpu_custom_call.1']
    #allocation8 [shape = 'u8[65536]{0}', space=vmem, size = 0x10000, scoped, tag = 'input window, operand 3, single buffered']
    #allocation9 [shape = 'u8[1024]{0}', space=vmem, size = 0x400, scoped, tag = 'output window, operand 0']
    %10 = vsyncpa [#allocation4], 0
    %s11 = scalar_lea.sflag [#allocation4], 1
    %12 = vsyncpa %s11, 0
    %13 = vsyncpa [#allocation7], 0
    %14 = vsyncpa [#allocation5], 0
    %s15 = scalar_lea.sflag [#allocation5], 1
    %16 = vsyncpa %s15, 0
    loop: start=0, step=1, limit=6
    $region2: #{tpu_custom_call.1} parent=1 // loop_pre_header
      _
    $region3: #{tpu_custom_call.1} parent=1 // loop_header
      %s18 = sphi 0, %s22
      %p19 = scmp.ge.s32.totalorder %s18, 6
      %s25 = sphi 0, %s37
      %s26 = sphi 0, %s33
      %s27 = sphi 0, %s25
      %s28 = sphi 0, %s26
      %s29 = sphi 0, %s27
      %s30 = sphi 0, %s28
      %s42 = sphi 0, %s44
      %s45 = sphi 0, %s42
      %s46 = sphi 0, %s45
      %s62 = sphi 0, %s46
      %s66 = sphi 0, %s66
      %s68 = sphi 0, %s66
      %s69 = sphi 0, %s68
      %s83 = sphi 0, %s69
      %s87 = sphi 0, %s87
      %s89 = sphi 0, %s87
      %s90 = sphi 0, %s89
      %s104 = sphi 0, %s90
      %s108 = sphi 0, %s108
      %s110 = sphi 0, %s108
      %s111 = sphi 0, %s110
      %s125 = sphi 0, %s111
      %s129 = sphi 0, %s129
      %s131 = sphi 0, %s129
      %s132 = sphi 0, %s131
      %s146 = sphi 0, %s132
      %s152 = sphi 0, %s154
      %s155 = sphi 0, %s152
      %s156 = sphi 0, %s155
      %s172 = sphi 0, %s156
    $region4: #{tpu_custom_call.1} parent=1 // loop_header_branch
      %21 = sbr.rel (%p19) target = $region8
    $region5: #{tpu_custom_call.1} parent=1 // loop_body
      %s23 = ssub.s32 %s18, 1
      %s24 = ssub.s32 %s18, 2
      %s31 = sadd.s32 1, %s26
      %p32 = scmp.ge.s32.totalorder %s31, 2
      %s33 = scalar_select %p32, 0, %s31
      %s34 = sadd.s32 1, %s25
      %s35 = scalar_select %p32, %s34, %s25
      %p36 = scmp.ge.s32.totalorder %s35, 2
      %s37 = scalar_select %p36, 0, %s35
      %s38 = ssub.s32 %s25, %s37
      %s39 = ssub.s32 %s26, %s33
      %s40 = sor.u32 %s38, %s39
      %p41 = scmp.eq.s32.totalorder %s40, 0
      %s43 = sadd.s32 %s42, 1
      %s44 = scalar_select %p41, %s42, %s43
      %p47 = pneg %p41
      %p48 = scmp.eq.s32.totalorder %s18, 3
      %p49 = por %p47, %p48
      %p50 = scmp.ne.s32.totalorder %s42, %s45
      %p51 = scmp.eq.s32.totalorder %s18, 0
      %p52 = por %p50, %p51
      %p53 = scmp.ne.s32.totalorder %s42, %s45
      %p54 = scmp.eq.s32.totalorder %s23, 3
      %p55 = por %p53, %p54
      %p56 = scmp.ne.s32.totalorder %s45, %s46
      %p57 = scmp.eq.s32.totalorder %s23, 0
      %p58 = por %p56, %p57
      %p59 = scmp.ne.s32.totalorder %s45, %s46
      %p60 = scmp.eq.s32.totalorder %s24, 3
      %p61 = por %p59, %p60
      %p63 = scmp.ne.s32.totalorder %s46, %s62
      %p64 = scmp.eq.s32.totalorder %s24, 0
      %p65 = por %p63, %p64
      %s67 = sadd.s32 %s66, 1
      %p70 = scmp.eq.s32.totalorder %s18, 3
      %p71 = scmp.ne.s32.totalorder %s66, %s68
      %p72 = scmp.eq.s32.totalorder %s18, 0
      %p73 = por %p71, %p72
      %p74 = scmp.ne.s32.totalorder %s66, %s68
      %p75 = scmp.eq.s32.totalorder %s23, 3
      %p76 = por %p74, %p75
      %p77 = scmp.ne.s32.totalorder %s68, %s69
      %p78 = scmp.eq.s32.totalorder %s23, 0
      %p79 = por %p77, %p78
      %p80 = scmp.ne.s32.totalorder %s68, %s69
      %p81 = scmp.eq.s32.totalorder %s24, 3
      %p82 = por %p80, %p81
      %p84 = scmp.ne.s32.totalorder %s69, %s83
      %p85 = scmp.eq.s32.totalorder %s24, 0
      %p86 = por %p84, %p85
      %s88 = sadd.s32 %s87, 1
      %p91 = scmp.eq.s32.totalorder %s18, 3
      %p92 = scmp.ne.s32.totalorder %s87, %s89
      %p93 = scmp.eq.s32.totalorder %s18, 0
      %p94 = por %p92, %p93
      %p95 = scmp.ne.s32.totalorder %s87, %s89
      %p96 = scmp.eq.s32.totalorder %s23, 3
      %p97 = por %p95, %p96
      %p98 = scmp.ne.s32.totalorder %s89, %s90
      %p99 = scmp.eq.s32.totalorder %s23, 0
      %p100 = por %p98, %p99
      %p101 = scmp.ne.s32.totalorder %s89, %s90
      %p102 = scmp.eq.s32.totalorder %s24, 3
      %p103 = por %p101, %p102
      %p105 = scmp.ne.s32.totalorder %s90, %s104
      %p106 = scmp.eq.s32.totalorder %s24, 0
      %p107 = por %p105, %p106
      %s109 = sadd.s32 %s108, 1
      %p112 = scmp.eq.s32.totalorder %s18, 3
      %p113 = scmp.ne.s32.totalorder %s108, %s110
      %p114 = scmp.eq.s32.totalorder %s18, 0
      %p115 = por %p113, %p114
      %p116 = scmp.ne.s32.totalorder %s108, %s110
      %p117 = scmp.eq.s32.totalorder %s23, 3
      %p118 = por %p116, %p117
      %p119 = scmp.ne.s32.totalorder %s110, %s111
      %p120 = scmp.eq.s32.totalorder %s23, 0
      %p121 = por %p119, %p120
      %p122 = scmp.ne.s32.totalorder %s110, %s111
      %p123 = scmp.eq.s32.totalorder %s24, 3
      %p124 = por %p122, %p123
      %p126 = scmp.ne.s32.totalorder %s111, %s125
      %p127 = scmp.eq.s32.totalorder %s24, 0
      %p128 = por %p126, %p127
      %s130 = sadd.s32 %s129, 1
      %p133 = scmp.eq.s32.totalorder %s18, 3
      %p134 = scmp.ne.s32.totalorder %s129, %s131
      %p135 = scmp.eq.s32.totalorder %s18, 0
      %p136 = por %p134, %p135
      %p137 = scmp.ne.s32.totalorder %s129, %s131
      %p138 = scmp.eq.s32.totalorder %s23, 3
      %p139 = por %p137, %p138
      %p140 = scmp.ne.s32.totalorder %s131, %s132
      %p141 = scmp.eq.s32.totalorder %s23, 0
      %p142 = por %p140, %p141
      %p143 = scmp.ne.s32.totalorder %s131, %s132
      %p144 = scmp.eq.s32.totalorder %s24, 3
      %p145 = por %p143, %p144
      %p147 = scmp.ne.s32.totalorder %s132, %s146
      %p148 = scmp.eq.s32.totalorder %s24, 0
      %p149 = por %p147, %p148
      %s150 = ssub.s32 %s25, %s37
      %p151 = scmp.eq.s32.totalorder %s150, 0
      %s153 = sadd.s32 %s152, 1
      %s154 = scalar_select %p151, %s152, %s153
      %p157 = pneg %p151
      %p158 = scmp.eq.s32.totalorder %s18, 3
      %p159 = por %p157, %p158
      %p160 = scmp.ne.s32.totalorder %s152, %s155
      %p161 = scmp.eq.s32.totalorder %s18, 0
      %p162 = por %p160, %p161
      %p163 = scmp.ne.s32.totalorder %s152, %s155
      %p164 = scmp.eq.s32.totalorder %s23, 3
      %p165 = por %p163, %p164
      %p166 = scmp.ne.s32.totalorder %s155, %s156
      %p167 = scmp.eq.s32.totalorder %s23, 0
      %p168 = por %p166, %p167
      %p169 = scmp.ne.s32.totalorder %s155, %s156
      %p170 = scmp.eq.s32.totalorder %s24, 3
      %p171 = por %p169, %p170
      %p173 = scmp.ne.s32.totalorder %s156, %s172
      %p174 = scmp.eq.s32.totalorder %s24, 0
      %p175 = por %p173, %p174
      %p176 = scmp.le.s32.totalorder 1, %s18
      %p177 = scmp.lt.s32.totalorder %s18, 5
      %p178 = pnand %p176, %p177
      %p179 = pneg %p178
      // Predicated region
      $region9: #{tpu_custom_call.1} parent=5 // pred_check
        _
      $region10: #{tpu_custom_call.1} parent=5 // pred_check_branch
        %181 = sbr.rel (%p178) target = $region12
      $region11: #{tpu_custom_call.1} parent=5 // pred_region
        %s182 = ssub.s32 %s18, 1
        // Predicated region
        $region13: #{tpu_custom_call.1} parent=11 // pred_check
          %p183 = pneg %p79
        $region14: #{tpu_custom_call.1} parent=11 // pred_check_branch
          %185 = sbr.rel (%p183) target = $region16
        $region15: #{tpu_custom_call.1} parent=11 // pred_region
          %s187 = ssub.s32 1024, 1024
          %188 = vsyncadd [#allocation7], %s187
          %s189 = sshll.u32 [#allocation6], 4
          %s190 = int_to_ptr.vmem [resolvable:$true] %s189
          %195 = dma.hbm_to_vmem [thread:$0]  %s1, 1024, %s190, [#allocation7], 64, 64, 4
        $region16: #{tpu_custom_call.1} parent=11 // pred_fallthru
          _
        // Predicated region
        $region17: #{tpu_custom_call.1} parent=11 // pred_check
          %p196 = pneg %p100
        $region18: #{tpu_custom_call.1} parent=11 // pred_check_branch
          %198 = sbr.rel (%p196) target = $region20
        $region19: #{tpu_custom_call.1} parent=11 // pred_region
          _
        $region20: #{tpu_custom_call.1} parent=11 // pred_fallthru
          _
        // Predicated region
        $region21: #{tpu_custom_call.1} parent=11 // pred_check
          %p199 = pneg %p121
        $region22: #{tpu_custom_call.1} parent=11 // pred_check_branch
          %201 = sbr.rel (%p199) target = $region24
        $region23: #{tpu_custom_call.1} parent=11 // pred_region
          %s203 = ssub.s32 2048, 2048
          %204 = vsyncadd [#allocation7], %s203
          %s205 = sshll.u32 [#allocation8], 4
          %s206 = int_to_ptr.vmem [resolvable:$true] %s205
          %211 = dma.hbm_to_vmem [thread:$0]  %s3, 2048, %s206, [#allocation7], 128, 128, 8
        $region24: #{tpu_custom_call.1} parent=11 // pred_fallthru
          _
        // Predicated region
        $region25: #{tpu_custom_call.1} parent=11 // pred_check
          %p212 = pneg %p142
        $region26: #{tpu_custom_call.1} parent=11 // pred_check_branch
          %214 = sbr.rel (%p212) target = $region28
        $region27: #{tpu_custom_call.1} parent=11 // pred_region
          _
        $region28: #{tpu_custom_call.1} parent=11 // pred_fallthru
          _
      $region12: #{tpu_custom_call.1} parent=5 // pred_fallthru
        _
      %p215 = scmp.lt.s32.totalorder %s18, 4
      // Predicated region
      $region29: #{tpu_custom_call.1} parent=5 // pred_check
        %p216 = pneg %p215
      $region30: #{tpu_custom_call.1} parent=5 // pred_check_branch
        %218 = sbr.rel (%p216) target = $region32
      $region31: #{tpu_custom_call.1} parent=5 // pred_region
        // Predicated region
        $region33: #{tpu_custom_call.1} parent=31 // pred_check
          %p219 = pneg %p52
        $region34: #{tpu_custom_call.1} parent=31 // pred_check_branch
          %221 = sbr.rel (%p219) target = $region36
        $region35: #{tpu_custom_call.1} parent=31 // pred_region
          %s222 = sand.u32 %s42, 1
          %s223 = scalar_lea.sflag [#allocation4], %s222
          %s224 = sand.u32 %s42, 1
          %s225 = smul.addr %s224, 64
          %s226 = scalar_lea.vmem [#allocation3], %s225
          %s227 = smul.u32 16, %s26
          %s229 = ssub.s32 1024, 1024
          %230 = vsyncadd %s223, %s229
          %s231 = smul.addr %s25, 32
          %s232 = sadd.s32 %s227, %s231
          %s233 = smul.addr %s232, 64
          %s234 = scalar_lea.hbm %s0, %s233
          %s235 = sshll.u32 %s226, 4
          %s236 = int_to_ptr.vmem [resolvable:$true] %s235
          %241 = dma.hbm_to_vmem [thread:$0]  %s234, 1024, %s236, %s223, 64, 64, 4
        $region36: #{tpu_custom_call.1} parent=31 // pred_fallthru
          _
      $region32: #{tpu_custom_call.1} parent=5 // pred_fallthru
        _
      %p242 = scmp.le.s32.totalorder 1, %s18
      %p243 = scmp.lt.s32.totalorder %s18, 5
      %p244 = pnand %p242, %p243
      %p245 = pneg %p244
      // Predicated region
      $region37: #{tpu_custom_call.1} parent=5 // pred_check
        _
      $region38: #{tpu_custom_call.1} parent=5 // pred_check_branch
        %247 = sbr.rel (%p244) target = $region40
      $region39: #{tpu_custom_call.1} parent=5 // pred_region
        %s248 = ssub.s32 %s18, 1
        %s249 = sand.u32 %s45, 1
        %s250 = scalar_lea.sflag [#allocation4], %s249
        %s251 = sand.u32 %s45, 1
        %s252 = smul.addr %s251, 64
        %s253 = scalar_lea.vmem [#allocation3], %s252
        // Predicated region
        $region41: #{tpu_custom_call.1} parent=39 // pred_check
          %p254 = pneg %p58
        $region42: #{tpu_custom_call.1} parent=39 // pred_check_branch
          %256 = sbr.rel (%p254) target = $region44
        $region43: #{tpu_custom_call.1} parent=39 // pred_region
          %257 = dma.done %s250, 1024
        $region44: #{tpu_custom_call.1} parent=39 // pred_fallthru
          _
        // Predicated region
        $region45: #{tpu_custom_call.1} parent=39 // pred_check
          %p258 = pneg %p79
        $region46: #{tpu_custom_call.1} parent=39 // pred_check_branch
          %260 = sbr.rel (%p258) target = $region48
        $region47: #{tpu_custom_call.1} parent=39 // pred_region
          %261 = dma.done [#allocation7], 1024
        $region48: #{tpu_custom_call.1} parent=39 // pred_fallthru
          _
        // Predicated region
        $region49: #{tpu_custom_call.1} parent=39 // pred_check
          %p262 = pneg %p121
        $region50: #{tpu_custom_call.1} parent=39 // pred_check_branch
          %264 = sbr.rel (%p262) target = $region52
        $region51: #{tpu_custom_call.1} parent=39 // pred_region
          %265 = dma.done [#allocation7], 2048
        $region52: #{tpu_custom_call.1} parent=39 // pred_fallthru
          _
        %s266 = sand.u32 %s45, 1
        %s267 = scalar_lea.sflag [#allocation4], %s266
        %s268 = sand.u32 %s45, 1
        %s269 = smul.addr %s268, 64
        %s270 = scalar_lea.vmem [#allocation3], %s269
        %p271 = pneg %p58
        %p272 = pneg %p55
        %p273 = pneg %p79
        %p274 = pneg %p76
        %p275 = pneg %p100
        %p276 = pneg %p97
        %p277 = pneg %p121
        %p278 = pneg %p118
        %p279 = pneg %p142
        %p280 = pneg %p139
        %p281 = pneg %p168
        %p282 = pneg %p165
        %s283 = sand.u32 %s155, 1
        %s284 = scalar_lea.sflag [#allocation5], %s283
        %s285 = sand.u32 %s155, 1
        %s286 = scalar_lea.vmem [#allocation9], %s285
        %s287 = smul.u32 16, %s28
        %p289 = scmp.eq.s32.totalorder %s28, 0
        // Predicated region
        $region53: #{tpu_custom_call.1} parent=39 // pred_check
          %p290 = pneg %p289
        $region54: #{tpu_custom_call.1} parent=39 // pred_check_branch
          %292 = sbr.rel (%p290) target = $region56
        $region55: #{tpu_custom_call.1} parent=39 // pred_region
          %293 = vst [vmem:[#allocation2] sm:$0x1] 0.0
        $region56: #{tpu_custom_call.1} parent=39 // pred_fallthru
          _
        %v294 = vld [vmem:[%s253] sm:$0xf]
        %v295 = vld [vmem:[%s253 + $0x4] sm:$0xf]
        %v296 = vld [vmem:[%s253 + $0x8] sm:$0xf]
        %v297 = vld [vmem:[%s253 + $0xc] sm:$0xf]
        %v298 = vld [vmem:[%s253 + $0x10] sm:$0xf]
        %v299 = vld [vmem:[%s253 + $0x14] sm:$0xf]
        %v300 = vld [vmem:[%s253 + $0x18] sm:$0xf]
        %v301 = vld [vmem:[%s253 + $0x1c] sm:$0xf]
        %v302 = vld [vmem:[%s253 + $0x20] sm:$0xf]
        %v303 = vld [vmem:[%s253 + $0x24] sm:$0xf]
        %v304 = vld [vmem:[%s253 + $0x28] sm:$0xf]
        %v305 = vld [vmem:[%s253 + $0x2c] sm:$0xf]
        %v306 = vld [vmem:[%s253 + $0x30] sm:$0xf]
        %v307 = vld [vmem:[%s253 + $0x34] sm:$0xf]
        %v308 = vld [vmem:[%s253 + $0x38] sm:$0xf]
        %v309 = vld [vmem:[%s253 + $0x3c] sm:$0xf]
        %v310 = vld [vmem:[#allocation6] sm:$0xf]
        %v311 = vld [vmem:[#allocation6 + $0x4] sm:$0xf]
        %v312 = vld [vmem:[#allocation6 + $0x8] sm:$0xf]
        %v313 = vld [vmem:[#allocation6 + $0xc] sm:$0xf]
        %v314 = vld [vmem:[#allocation6 + $0x10] sm:$0xf]
        %v315 = vld [vmem:[#allocation6 + $0x14] sm:$0xf]
        %v316 = vld [vmem:[#allocation6 + $0x18] sm:$0xf]
        %v317 = vld [vmem:[#allocation6 + $0x1c] sm:$0xf]
        %v318 = vld [vmem:[#allocation6 + $0x20] sm:$0xf]
        %v319 = vld [vmem:[#allocation6 + $0x24] sm:$0xf]
        %v320 = vld [vmem:[#allocation6 + $0x28] sm:$0xf]
        %v321 = vld [vmem:[#allocation6 + $0x2c] sm:$0xf]
        %v322 = vld [vmem:[#allocation6 + $0x30] sm:$0xf]
        %v323 = vld [vmem:[#allocation6 + $0x34] sm:$0xf]
        %v324 = vld [vmem:[#allocation6 + $0x38] sm:$0xf]
        %v325 = vld [vmem:[#allocation6 + $0x3c] sm:$0xf]
        %v326 = vld [vmem:[%s2] sm:$0x1]
        %v328 = vlaneseq
        %v329 = vshrl.u32 %v328, 7
        %v330 = vsub.s32 0, %v329
        %v331 = vrot.slane %v326, %v330
        %v349 = vunpack.c.l.b16 %v294
        %v350 = vunpack.c.l.b16 %v295
        %v351 = vunpack.c.l.b16 %v296
        %v352 = vunpack.c.l.b16 %v297
        %v353 = vunpack.c.l.b16 %v298
        %v354 = vunpack.c.l.b16 %v299
        %v355 = vunpack.c.l.b16 %v300
        %v356 = vunpack.c.l.b16 %v301
        %v357 = vunpack.c.l.b16 %v302
        %v358 = vunpack.c.l.b16 %v303
        %v359 = vunpack.c.l.b16 %v304
        %v360 = vunpack.c.l.b16 %v305
        %v361 = vunpack.c.l.b16 %v306
        %v362 = vunpack.c.l.b16 %v307
        %v363 = vunpack.c.l.b16 %v308
        %v364 = vunpack.c.l.b16 %v309
        %v365 = vpack.c.b16 %v350, %v349
        %v366 = vpack.c.b16 %v352, %v351
        %v367 = vpack.c.b16 %v354, %v353
        %v368 = vpack.c.b16 %v356, %v355
        %v369 = vpack.c.b16 %v358, %v357
        %v370 = vpack.c.b16 %v360, %v359
        %v371 = vpack.c.b16 %v362, %v361
        %v372 = vpack.c.b16 %v364, %v363
        %v397 = vunpack.c.l.b16 %v310
        %v398 = vunpack.c.l.b16 %v311
        %v399 = vunpack.c.l.b16 %v312
        %v400 = vunpack.c.l.b16 %v313
        %v401 = vunpack.c.l.b16 %v314
        %v402 = vunpack.c.l.b16 %v315
        %v403 = vunpack.c.l.b16 %v316
        %v404 = vunpack.c.l.b16 %v317
        %v405 = vunpack.c.l.b16 %v318
        %v406 = vunpack.c.l.b16 %v319
        %v407 = vunpack.c.l.b16 %v320
        %v408 = vunpack.c.l.b16 %v321
        %v409 = vunpack.c.l.b16 %v322
        %v410 = vunpack.c.l.b16 %v323
        %v411 = vunpack.c.l.b16 %v324
        %v412 = vunpack.c.l.b16 %v325
        %v413 = vpack.c.b16 %v398, %v397
        %v414 = vpack.c.b16 %v400, %v399
        %v415 = vpack.c.b16 %v402, %v401
        %v416 = vpack.c.b16 %v404, %v403
        %v417 = vpack.c.b16 %v406, %v405
        %v418 = vpack.c.b16 %v408, %v407
        %v419 = vpack.c.b16 %v410, %v409
        %v420 = vpack.c.b16 %v412, %v411
        %429 = vmatprep.subr.bf16.mxu0 0
        %430 = vmatpush1.bf16.msra.mxu0 %v413
        %431 = vmatprep.subr.bf16.mxu0 0
        %432 = vmatpush1.bf16.msra.mxu0 %v414
        %433 = vmatprep.subr.bf16.mxu0 0
        %434 = vmatpush1.bf16.msra.mxu0 %v415
        %435 = vmatprep.subr.bf16.mxu0 0
        %436 = vmatpush1.bf16.msra.mxu0 %v416
        %437 = vmatprep.subr.bf16.mxu0 0
        %438 = vmatpush1.bf16.msra.mxu0 %v417
        %439 = vmatprep.subr.bf16.mxu0 0
        %440 = vmatpush1.bf16.msra.mxu0 %v418
        %441 = vmatprep.subr.bf16.mxu0 0
        %442 = vmatpush1.bf16.msra.mxu0 %v419
        %443 = vmatprep.subr.bf16.mxu0 0
        %444 = vmatpush1.bf16.msra.mxu0 %v420
        %445 = vmatprep.subr.bf16.mxu0 0
        %446 = vmatpush1.bf16.msra.mxu0 0
        %447 = vmatprep.subr.bf16.mxu0 0
        %448 = vmatpush1.bf16.msra.mxu0 0
        %449 = vmatprep.subr.bf16.mxu0 0
        %450 = vmatpush1.bf16.msra.mxu0 0
        %451 = vmatprep.subr.bf16.mxu0 0
        %452 = vmatpush1.bf16.msra.mxu0 0
        %453 = vmatprep.subr.bf16.mxu0 0
        %454 = vmatpush1.bf16.msra.mxu0 0
        %455 = vmatprep.subr.bf16.mxu0 0
        %456 = vmatpush1.bf16.msra.mxu0 0
        %457 = vmatprep.subr.bf16.mxu0 0
        %458 = vmatpush1.bf16.msra.mxu0 0
        %459 = vmatprep.subr.bf16.mxu0 0
        %460 = vmatpush1.bf16.msra.mxu0 0
        %461 = vmatprep.mubr.bf16.mxu0 0
        %462 = vmatmul.mubr.bf16.gmra.mrb[0].mxu0 %v365
        %v463 = vpop.f32.mrb[0].mxu0
        %v464 = vadd.f32 %v331, %v463
        %v465 = vpop.f32.mrb[0].mxu0
        %v466 = vpop.f32.mrb[0].mxu0
        %v467 = vadd.f32 %v331, %v466
        %v468 = vpop.f32.mrb[0].mxu0
        %469 = vmatprep.mubr.bf16.mxu0 0
        %470 = vmatmul.mubr.bf16.gmra.mrb[0].mxu0 %v366
        %v471 = vpop.f32.mrb[0].mxu0
        %v472 = vadd.f32 %v331, %v471
        %v473 = vpop.f32.mrb[0].mxu0
        %v474 = vpop.f32.mrb[0].mxu0
        %v475 = vadd.f32 %v331, %v474
        %v476 = vpop.f32.mrb[0].mxu0
        %477 = vmatprep.mubr.bf16.mxu0 0
        %478 = vmatmul.mubr.bf16.gmra.mrb[0].mxu0 %v367
        %v479 = vpop.f32.mrb[0].mxu0
        %v480 = vadd.f32 %v331, %v479
        %v481 = vpop.f32.mrb[0].mxu0
        %v482 = vpop.f32.mrb[0].mxu0
        %v483 = vadd.f32 %v331, %v482
        %v484 = vpop.f32.mrb[0].mxu0
        %485 = vmatprep.mubr.bf16.mxu0 0
        %486 = vmatmul.mubr.bf16.gmra.mrb[0].mxu0 %v368
        %v487 = vpop.f32.mrb[0].mxu0
        %v488 = vadd.f32 %v331, %v487
        %v489 = vpop.f32.mrb[0].mxu0
        %v490 = vpop.f32.mrb[0].mxu0
        %v491 = vadd.f32 %v331, %v490
        %v492 = vpop.f32.mrb[0].mxu0
        %493 = vmatprep.mubr.bf16.mxu0 0
        %494 = vmatmul.mubr.bf16.gmra.mrb[0].mxu0 %v369
        %v495 = vpop.f32.mrb[0].mxu0
        %v496 = vadd.f32 %v331, %v495
        %v497 = vpop.f32.mrb[0].mxu0
        %v498 = vpop.f32.mrb[0].mxu0
        %v499 = vadd.f32 %v331, %v498
        %v500 = vpop.f32.mrb[0].mxu0
        %501 = vmatprep.mubr.bf16.mxu0 0
        %502 = vmatmul.mubr.bf16.gmra.mrb[0].mxu0 %v370
        %v503 = vpop.f32.mrb[0].mxu0
        %v504 = vadd.f32 %v331, %v503
        %v505 = vpop.f32.mrb[0].mxu0
        %v506 = vpop.f32.mrb[0].mxu0
        %v507 = vadd.f32 %v331, %v506
        %v508 = vpop.f32.mrb[0].mxu0
        %509 = vmatprep.mubr.bf16.mxu0 0
        %510 = vmatmul.mubr.bf16.gmra.mrb[0].mxu0 %v371
        %v511 = vpop.f32.mrb[0].mxu0
        %v512 = vadd.f32 %v331, %v511
        %v513 = vpop.f32.mrb[0].mxu0
        %v514 = vpop.f32.mrb[0].mxu0
        %v515 = vadd.f32 %v331, %v514
        %v516 = vpop.f32.mrb[0].mxu0
        %517 = vmatprep.mubr.bf16.mxu0 0
        %518 = vmatmul.mubr.bf16.gmra.mrb[0].mxu0 %v372
        %v519 = vpop.f32.mrb[0].mxu0
        %v520 = vadd.f32 %v331, %v519
        %v521 = vpop.f32.mrb[0].mxu0
        %v522 = vpop.f32.mrb[0].mxu0
        %v523 = vadd.f32 %v331, %v522
        %v524 = vpop.f32.mrb[0].mxu0
        %525 = vdwg.mxu0
        %v526 = vmax.f32 %v464, 0.0
        %v527 = vmax.f32 %v467, 0.0
        %v528 = vmax.f32 %v472, 0.0
        %v529 = vmax.f32 %v475, 0.0
        %v530 = vmax.f32 %v480, 0.0
        %v531 = vmax.f32 %v483, 0.0
        %v532 = vmax.f32 %v488, 0.0
        %v533 = vmax.f32 %v491, 0.0
        %v534 = vmax.f32 %v496, 0.0
        %v535 = vmax.f32 %v499, 0.0
        %v536 = vmax.f32 %v504, 0.0
        %v537 = vmax.f32 %v507, 0.0
        %v538 = vmax.f32 %v512, 0.0
        %v539 = vmax.f32 %v515, 0.0
        %v540 = vmax.f32 %v520, 0.0
        %v541 = vmax.f32 %v523, 0.0
        %v542 = vld [vmem:[#allocation2] sm:$0x1]
        %v543 = vadd.f32 %v526, %v527
        %v544 = vadd.f32 %v543, %v528
        %v545 = vadd.f32 %v544, %v529
        %v546 = vadd.f32 %v545, %v530
        %v547 = vadd.f32 %v546, %v531
        %v548 = vadd.f32 %v547, %v532
        %v549 = vadd.f32 %v548, %v533
        %v550 = vadd.f32 %v549, %v534
        %v551 = vadd.f32 %v550, %v535
        %v552 = vadd.f32 %v551, %v536
        %v553 = vadd.f32 %v552, %v537
        %v554 = vadd.f32 %v553, %v538
        %v555 = vadd.f32 %v554, %v539
        %v556 = vadd.f32 %v555, %v540
        %v557 = vadd.f32 %v556, %v541
        %v558 = vrot.slane %v557, 4
        %v559 = vadd.f32 %v557, %v558
        %v560 = vrot.slane %v559, 2
        %v561 = vadd.f32 %v559, %v560
        %v562 = vrot.slane %v561, 1
        %v563 = vadd.f32 %v561, %v562
        %v564 = vadd.f32 %v542, %v563
        %565 = vst [vmem:[#allocation2] sm:$0x1] %v564
        %p566 = scmp.eq.s32.totalorder %s28, 1
        // Predicated region
        $region57: #{tpu_custom_call.1} parent=39 // pred_check
          %p567 = pneg %p566
        $region58: #{tpu_custom_call.1} parent=39 // pred_check_branch
          %569 = sbr.rel (%p567) target = $region60
        $region59: #{tpu_custom_call.1} parent=39 // pred_region
          %v570 = vld [vmem:[#allocation2] sm:$0x1]
          %v571 = vld [vmem:[#allocation8] sm:$0xff]
          %v572 = vld [vmem:[#allocation8 + $0x8] sm:$0xff]
          %v573 = vld [vmem:[#allocation8 + $0x10] sm:$0xff]
          %v574 = vld [vmem:[#allocation8 + $0x18] sm:$0xff]
          %v575 = vld [vmem:[#allocation8 + $0x20] sm:$0xff]
          %v576 = vld [vmem:[#allocation8 + $0x28] sm:$0xff]
          %v577 = vld [vmem:[#allocation8 + $0x30] sm:$0xff]
          %v578 = vld [vmem:[#allocation8 + $0x38] sm:$0xff]
          %v579 = vld [vmem:[#allocation8 + $0x40] sm:$0xff]
          %v580 = vld [vmem:[#allocation8 + $0x48] sm:$0xff]
          %v581 = vld [vmem:[#allocation8 + $0x50] sm:$0xff]
          %v582 = vld [vmem:[#allocation8 + $0x58] sm:$0xff]
          %v583 = vld [vmem:[#allocation8 + $0x60] sm:$0xff]
          %v584 = vld [vmem:[#allocation8 + $0x68] sm:$0xff]
          %v585 = vld [vmem:[#allocation8 + $0x70] sm:$0xff]
          %v586 = vld [vmem:[#allocation8 + $0x78] sm:$0xff]
          %v587 = vld [vmem:[%s4] sm:$0x1]
          %588 = vmatprep.subr.mxu0 0.0
          %589 = vmatpush1.msra.mxu0 %v571
          %590 = vmatprep.subr.mxu0 0.0
          %591 = vmatpush1.msra.mxu0 %v572
          %592 = vmatprep.subr.mxu0 0.0
          %593 = vmatpush1.msra.mxu0 %v573
          %594 = vmatprep.subr.mxu0 0.0
          %595 = vmatpush1.msra.mxu0 %v574
          %596 = vmatprep.subr.mxu0 0.0
          %597 = vmatpush1.msra.mxu0 %v575
          %598 = vmatprep.subr.mxu0 0.0
          %599 = vmatpush1.msra.mxu0 %v576
          %600 = vmatprep.subr.mxu0 0.0
          %601 = vmatpush1.msra.mxu0 %v577
          %602 = vmatprep.subr.mxu0 0.0
          %603 = vmatpush1.msra.mxu0 %v578
          %604 = vmatprep.subr.mxu0 0.0
          %605 = vmatpush1.msra.mxu0 %v579
          %606 = vmatprep.subr.mxu0 0.0
          %607 = vmatpush1.msra.mxu0 %v580
          %608 = vmatprep.subr.mxu0 0.0
          %609 = vmatpush1.msra.mxu0 %v581
          %610 = vmatprep.subr.mxu0 0.0
          %611 = vmatpush1.msra.mxu0 %v582
          %612 = vmatprep.subr.mxu0 0.0
          %613 = vmatpush1.msra.mxu0 %v583
          %614 = vmatprep.subr.mxu0 0.0
          %615 = vmatpush1.msra.mxu0 %v584
          %616 = vmatprep.subr.mxu0 0.0
          %617 = vmatpush1.msra.mxu0 %v585
          %618 = vmatprep.subr.mxu0 0.0
          %619 = vmatpush1.msra.mxu0 %v586
          %620 = vmatprep.subr.mxu0 0.0
          %621 = vmatpush1.msra.mxu0 0.0
          %622 = vmatprep.subr.mxu0 0.0
          %623 = vmatpush1.msra.mxu0 0.0
          %624 = vmatprep.subr.mxu0 0.0
          %625 = vmatpush1.msra.mxu0 0.0
          %626 = vmatprep.subr.mxu0 0.0
          %627 = vmatpush1.msra.mxu0 0.0
          %628 = vmatprep.subr.mxu0 0.0
          %629 = vmatpush1.msra.mxu0 0.0
          %630 = vmatprep.subr.mxu0 0.0
          %631 = vmatpush1.msra.mxu0 0.0
          %632 = vmatprep.subr.mxu0 0.0
          %633 = vmatpush1.msra.mxu0 0.0
          %634 = vmatprep.subr.mxu0 0.0
          %635 = vmatpush1.msra.mxu0 0.0
          %636 = vmatprep.subr.mxu0 0.0
          %637 = vmatpush1.msra.mxu0 0.0
          %638 = vmatprep.subr.mxu0 0.0
          %639 = vmatpush1.msra.mxu0 0.0
          %640 = vmatprep.subr.mxu0 0.0
          %641 = vmatpush1.msra.mxu0 0.0
          %642 = vmatprep.subr.mxu0 0.0
          %643 = vmatpush1.msra.mxu0 0.0
          %644 = vmatprep.subr.mxu0 0.0
          %645 = vmatpush1.msra.mxu0 0.0
          %646 = vmatprep.subr.mxu0 0.0
          %647 = vmatpush1.msra.mxu0 0.0
          %648 = vmatprep.subr.mxu0 0.0
          %649 = vmatpush1.msra.mxu0 0.0
          %650 = vmatprep.subr.mxu0 0.0
          %651 = vmatpush1.msra.mxu0 0.0
          %652 = vmatprep.mubr.f32.mxu0 0.0
          %653 = vmatmul.mubr.f32.gmra.mrb[0].mxu0 %v570
          %v654 = vpop.f32.mrb[0].mxu0
          %v655 = vadd.f32 %v587, %v654
          %v656 = vpop.f32.mrb[0].mxu0
          %657 = vdwg.mxu0
          %658 = vst [vmem:[%s286] sm:$0x1] %v655
        $region60: #{tpu_custom_call.1} parent=39 // pred_fallthru
          _
        %s659 = sand.u32 %s155, 1
        %s660 = scalar_lea.sflag [#allocation5], %s659
        %s661 = sand.u32 %s155, 1
        %s662 = scalar_lea.vmem [#allocation9], %s661
        // Predicated region
        $region61: #{tpu_custom_call.1} parent=39 // pred_check
          %p663 = pneg %p165
        $region62: #{tpu_custom_call.1} parent=39 // pred_check_branch
          %665 = sbr.rel (%p663) target = $region64
        $region63: #{tpu_custom_call.1} parent=39 // pred_region
          %s667 = ssub.s32 16, 16
          %668 = vsyncadd %s660, %s667
          %s669 = smul.addr %s27, 16
          %s670 = scalar_lea.hbm %s5, %s669
          %s672 = sshll.u32 %s662, 4
          %s673 = int_to_ptr.vmem [resolvable:$true] %s672
          %675 = dma.vmem_to_hbm [thread:$0]  %s673, 16, %s670, %s660
        $region64: #{tpu_custom_call.1} parent=39 // pred_fallthru
          _
      $region40: #{tpu_custom_call.1} parent=5 // pred_fallthru
        _
      %p676 = scmp.le.s32.totalorder 2, %s18
      // Predicated region
      $region65: #{tpu_custom_call.1} parent=5 // pred_check
        %p677 = pneg %p676
      $region66: #{tpu_custom_call.1} parent=5 // pred_check_branch
        %679 = sbr.rel (%p677) target = $region68
      $region67: #{tpu_custom_call.1} parent=5 // pred_region
        %s680 = ssub.s32 %s18, 2
        // Predicated region
        $region69: #{tpu_custom_call.1} parent=67 // pred_check
          %p681 = pneg %p171
        $region70: #{tpu_custom_call.1} parent=67 // pred_check_branch
          %683 = sbr.rel (%p681) target = $region72
        $region71: #{tpu_custom_call.1} parent=67 // pred_region
          %s684 = sand.u32 %s156, 1
          %s685 = scalar_lea.sflag [#allocation5], %s684
          %s686 = sand.u32 %s156, 1
          %s687 = scalar_lea.vmem [#allocation9], %s686
          %688 = dma.done %s685, 16
        $region72: #{tpu_custom_call.1} parent=67 // pred_fallthru
          _
      $region68: #{tpu_custom_call.1} parent=5 // pred_fallthru
        _
    $region6: #{tpu_custom_call.1} parent=1 // loop_footer
      %s22 = sadd.s32 1, %s18
    $region7: #{tpu_custom_call.1} parent=1 // loop_footer_branch
      %17 = sbr.rel target = $region3
    $region8: #{tpu_custom_call.1} parent=1 // loop_exit
      _
    %689 = vsyncpa [#allocation4], 1
    %s690 = scalar_lea.sflag [#allocation4], 1
    %691 = vsyncpa %s690, 1
    %692 = vsyncpa [#allocation7], 1
    %693 = vsyncpa [#allocation5], 1
    %s694 = scalar_lea.sflag [#allocation5], 1
    %695 = vsyncpa %s694, 1

</llo_original>
